<compile_context>
chip_gen: v6e
topology: v6e:2x2x1
jax: 0.10.0
libtpu: 0.0.40
codegen_flags: <defaults>
</compile_context>

<pallas_src>
import functools

import jax
import jax.numpy as jnp
from jax import lax
from jax.experimental import pallas as pl
from jax.experimental.pallas import tpu as pltpu


_SQRT_HALF = 0.7071067811865476  # 1/sqrt(2), for exact (erf) GELU
_MIB = 1024 * 1024


# ----------------------------- Pallas kernel --------------------------------

def _vision_head_kernel(x_ref, w1_ref, b1_ref, w2_ref, b2_ref, o_ref, h_ref,
                        *, approximate_gelu):
    """One (i, jo, ji) grid step.

    x_ref : (tm, n_embed)                 VMEM (varies with i)
    w1_ref: (n_embed, image_token_embed)  VMEM (resident, single-buffered)
    b1_ref: (1, image_token_embed)        VMEM (resident, single-buffered)
    w2_ref: (image_token_embed, tn)       VMEM (varies with jo*n_ji + ji)
    b2_ref: (1, tn)                       VMEM (varies with jo*n_ji + ji)
    o_ref : (tm, tn)                      VMEM (varies with i, jo, ji)
    h_ref : (tm, image_token_embed)       VMEM scratch in w2's dtype, persists
                                          across the innermost (ji) axis.

    NOTE: the h cache is only valid because ji is the innermost "arbitrary"
    (sequential) axis, so ji == 0 is always visited first for every (i, jo)
    pair a core owns; do not reorder the grid without restructuring the guard.
    """
    # Linear1 + GELU: compute once per (i, jo), reuse across all ji.
    @pl.when(pl.program_id(2) == 0)
    def _():
        h = jnp.dot(x_ref[...], w1_ref[...], preferred_element_type=jnp.float32)
        h = h + b1_ref[...].astype(jnp.float32)
        if approximate_gelu:
            h = jax.nn.gelu(h, approximate=True)
        else:
            # Exact (erf-based) GELU, matching torch.nn.GELU() default.
            h = 0.5 * h * (1.0 + lax.erf(h * _SQRT_HALF))
        # Single cast to the MXU input dtype; avoids a per-ji VPU cast and a
        # full f32 VMEM re-read on every column tile.
        h_ref[...] = h.astype(h_ref.dtype)

    # Linear2 on the cached activations for this output-column tile.
    y = jnp.dot(h_ref[...], w2_ref[...], preferred_element_type=jnp.float32)
    y = y + b2_ref[...].astype(jnp.float32)
    o_ref[...] = y.astype(o_ref.dtype)


# ------------------------------ JAX wrapper ----------------------------------

def _round_up(x, m):
    return ((x + m - 1) // m) * m


def _vmem_capacity_bytes():
    """Per-core VMEM capacity; conservative fallback if the query fails."""
    try:
        return int(pltpu.get_tpu_info().vmem_capacity_bytes)
    except Exception:
        return 64 * _MIB  # v7x per-TensorCore VMEM (the smallest current chip)


@functools.partial(jax.jit, static_argnames=("tm", "tn", "approximate_gelu"))
def vision_head(x, w1, b1, w2, b2, *, tm=512, tn=2048, approximate_gelu=False):
    """x: [..., n_embed] -> [..., image_token_size] (same semantics as VisionHead).

    w1: [n_embed, image_token_embed], b1: [image_token_embed]
    w2: [image_token_embed, image_token_size], b2: [image_token_size]
    (weights are the transpose of torch.nn.Linear.weight)
    """
    n_embed = x.shape[-1]
    image_token_embed = w1.shape[1]
    image_token_size = w2.shape[1]
    assert w1.shape[0] == n_embed and w2.shape[0] == image_token_embed
    assert b1.shape == (image_token_embed,) and b2.shape == (image_token_size,)

    lead_shape = x.shape[:-1]
    x2d = x.reshape(-1, n_embed)
    m = x2d.shape[0]

    # --- tile selection ------------------------------------------------------
    tm_eff = min(_round_up(tm, 8), _round_up(m, 8))
    tn_eff = min(_round_up(tn, 128), _round_up(image_token_size, 128))

    x_bytes = jnp.dtype(x.dtype).itemsize
    w1_bytes = jnp.dtype(w1.dtype).itemsize
    w2_bytes = jnp.dtype(w2.dtype).itemsize
    o_bytes = jnp.dtype(x.dtype).itemsize
    h_bytes = jnp.dtype(w2.dtype).itemsize  # scratch lives in w2's dtype

    def vmem_est(tm_e, tn_e):
        return (2 * tm_e * n_embed * x_bytes                # x tile (x2 buffers)
                + 1 * n_embed * image_token_embed * w1_bytes  # w1 (Buffered(1))
                + 1 * image_token_embed * w1_bytes            # b1 (Buffered(1))
                + 2 * image_token_embed * tn_e * w2_bytes     # w2 tile
                + 2 * tn_e * w2_bytes                         # b2 tile
                + 2 * tm_e * tn_e * o_bytes                   # out tile
                + tm_e * image_token_embed * h_bytes)         # h scratch

    vmem_cap = _vmem_capacity_bytes()
    budget = int(vmem_cap * 0.8)
    # Shrink tiles if the estimate would overflow this chip's VMEM.
    while vmem_est(tm_eff, tn_eff) > budget:
        if tn_eff > 512:
            tn_eff = _round_up(tn_eff // 2, 128)
        elif tm_eff > 64:
            tm_eff = _round_up(tm_eff // 2, 8)
        else:
            break

    # --- grid ----------------------------------------------------------------
    m_pad = _round_up(m, tm_eff)
    if m_pad != m:
        x2d = jnp.pad(x2d, ((0, m_pad - m), (0, 0)))   # cheap: activations only

    grid_i = m_pad // tm_eff
    grid_j = pl.cdiv(image_token_size, tn_eff)   # last tile may be partial (masked)

    # When the row grid collapses to 1 (common decode case), split the output
    # columns across both TensorCores via a "parallel" jo axis.  h is
    # recomputed once per (i, jo) — negligible vs. the second matmul.
    n_jo = 2 if (grid_i == 1 and grid_j >= 2 and grid_j % 2 == 0) else 1
    n_ji = grid_j // n_jo
    grid = (grid_i, n_jo, n_ji)

    b1_2d = b1.reshape(1, image_token_embed)
    b2_2d = b2.reshape(1, image_token_size)

    in_specs = [
        pl.BlockSpec((tm_eff, n_embed), lambda i, jo, ji: (i, 0)),
        pl.BlockSpec((n_embed, image_token_embed), lambda i, jo, ji: (0, 0),
                     pipeline_mode=pl.Buffered(1)),
        pl.BlockSpec((1, image_token_embed), lambda i, jo, ji: (0, 0),
                     pipeline_mode=pl.Buffered(1)),
        pl.BlockSpec((image_token_embed, tn_eff),
                     lambda i, jo, ji: (0, jo * n_ji + ji)),
        pl.BlockSpec((1, tn_eff), lambda i, jo, ji: (0, jo * n_ji + ji)),
    ]
    out_spec = pl.BlockSpec((tm_eff, tn_eff),
                            lambda i, jo, ji: (i, jo * n_ji + ji))

    est = vmem_est(tm_eff, tn_eff)
    vmem_limit = min(int(vmem_cap * 0.9),
                     max(32 * _MIB, int(est * 1.3) + _MIB))

    flops = 2 * m_pad * image_token_embed * (n_embed + image_token_size)
    transcendentals = m_pad * image_token_embed  # one erf per hidden activation
    bytes_accessed = (m_pad * n_embed * x_bytes
                      + n_embed * image_token_embed * w1_bytes
                      + image_token_embed * w1_bytes
                      + grid_i * (image_token_embed * image_token_size * w2_bytes
                                  + image_token_size * w2_bytes)
                      + m_pad * image_token_size * o_bytes)
    cost = pl.CostEstimate(flops=flops, transcendentals=transcendentals,
                           bytes_accessed=bytes_accessed)

    kernel = functools.partial(_vision_head_kernel,
                               approximate_gelu=approximate_gelu)

    out = pl.pallas_call(
        kernel,
        out_shape=jax.ShapeDtypeStruct((m_pad, image_token_size), x.dtype),
        grid_spec=pltpu.PrefetchScalarGridSpec(
            num_scalar_prefetch=0,
            grid=grid,
            in_specs=in_specs,
            out_specs=out_spec,
            scratch_shapes=[pltpu.VMEM((tm_eff, image_token_embed), w2.dtype)],
        ),
        compiler_params=pltpu.CompilerParams(
            dimension_semantics=("parallel", "parallel", "arbitrary"),
            vmem_limit_bytes=vmem_limit,
        ),
        cost_estimate=cost,
    )(x2d, w1, b1_2d, w2, b2_2d)

    if m_pad != m:
        out = out[:m]
    return out.reshape(*lead_shape, image_token_size)


# -------------------------- reference (pure JAX) ------------------------------

def vision_head_ref(x, w1, b1, w2, b2):
    h = x @ w1 + b1
    h = 0.5 * h * (1.0 + lax.erf(h * _SQRT_HALF))
    return h @ w2 + b2


# ---------------------------------- main --------------------------------------

if __name__ == "__main__":
    key = jax.random.PRNGKey(0)

    # --- Test 1: small, VisionHead-consistent shapes (aligned) -----------------
    batch, seq = 2, 8
    n_embed, image_token_embed, image_token_size = 32, 64, 128

    kx, kw1, kb1, kw2, kb2 = jax.random.split(key, 5)
    x = jax.random.normal(kx, (batch, seq, n_embed), dtype=jnp.float32)
    w1 = jax.random.normal(kw1, (n_embed, image_token_embed), dtype=jnp.float32) * 0.05
    b1 = jax.random.normal(kb1, (image_token_embed,), dtype=jnp.float32) * 0.05
    w2 = jax.random.normal(kw2, (image_token_embed, image_token_size), dtype=jnp.float32) * 0.05
    b2 = jax.random.normal(kb2, (image_token_size,), dtype=jnp.float32) * 0.05

    out = jax.block_until_ready(vision_head(x, w1, b1, w2, b2))
    ref = vision_head_ref(x.reshape(-1, n_embed), w1, b1, w2, b2).reshape(
        batch, seq, image_token_size)
    assert out.shape == (batch, seq, image_token_size), out.shape
    assert jnp.allclose(out, ref, atol=1e-5, rtol=1e-5), float(
        jnp.max(jnp.abs(out - ref)))

    # --- Test 2: ragged shapes (M padding + uneven last column tile) -----------
    batch2, seq2 = 3, 5                       # m = 15 (not a multiple of 8)
    image_token_size2 = 200                   # not a multiple of 128
    k2x, k2w2, k2b2 = jax.random.split(jax.random.PRNGKey(1), 3)
    x2 = jax.random.normal(k2x, (batch2, seq2, n_embed), dtype=jnp.float32)
    w2b = jax.random.normal(k2w2, (image_token_embed, image_token_size2),
                            dtype=jnp.float32) * 0.05
    b2b = jax.random.normal(k2b2, (image_token_size2,), dtype=jnp.float32) * 0.05

    out2 = jax.block_until_ready(vision_head(x2, w1, b1, w2b, b2b))
    ref2 = vision_head_ref(x2.reshape(-1, n_embed), w1, b1, w2b, b2b).reshape(
        batch2, seq2, image_token_size2)
    assert out2.shape == (batch2, seq2, image_token_size2), out2.shape
    assert jnp.allclose(out2, ref2, atol=1e-5, rtol=1e-5), float(
        jnp.max(jnp.abs(out2 - ref2)))

    # --- Test 3: bf16 path, multiple column tiles, jo-split across cores -------
    n_embed3, ite3, its3 = 128, 256, 512
    k3 = jax.random.split(jax.random.PRNGKey(2), 5)
    x3 = (jax.random.normal(k3[0], (1, 8, n_embed3), jnp.float32)).astype(jnp.bfloat16)
    w13 = (jax.random.normal(k3[1], (n_embed3, ite3), jnp.float32) * 0.05).astype(jnp.bfloat16)
    b13 = (jax.random.normal(k3[2], (ite3,), jnp.float32) * 0.05).astype(jnp.bfloat16)
    w23 = (jax.random.normal(k3[3], (ite3, its3), jnp.float32) * 0.05).astype(jnp.bfloat16)
    b23 = (jax.random.normal(k3[4], (its3,), jnp.float32) * 0.05).astype(jnp.bfloat16)

    # tn=128 forces grid_j=4 so (grid_i=1, n_jo=2, n_ji=2) exercises the split.
    out3 = jax.block_until_ready(vision_head(x3, w13, b13, w23, b23, tn=128))
    ref3 = vision_head_ref(
        x3.reshape(-1, n_embed3).astype(jnp.float32), w13.astype(jnp.float32),
        b13.astype(jnp.float32), w23.astype(jnp.float32),
        b23.astype(jnp.float32)).reshape(1, 8, its3)
    assert out3.shape == (1, 8, its3), out3.shape
    assert jnp.allclose(out3.astype(jnp.float32), ref3, atol=5e-2, rtol=5e-2), float(
        jnp.max(jnp.abs(out3.astype(jnp.float32) - ref3)))

    print("KERNEL_OK")
</pallas_src>

<mosaic_0001>
module attributes {stable_mosaic.version = 11 : i64} {
  func.func @_vision_head_kernel(%arg0: i32, %arg1: i32, %arg2: i32, %arg3: memref<16x32xf32, #tpu.memory_space<vmem>>, %arg4: memref<32x64xf32, #tpu.memory_space<vmem>>, %arg5: memref<1x64xf32, #tpu.memory_space<vmem>>, %arg6: memref<64x128xf32, #tpu.memory_space<vmem>>, %arg7: memref<1x128xf32, #tpu.memory_space<vmem>>, %arg8: memref<16x128xf32, #tpu.memory_space<vmem>>, %arg9: memref<16x64xf32, #tpu.memory_space<vmem>>) attributes {dimension_semantics = [#tpu.dimension_semantics<parallel>, #tpu.dimension_semantics<parallel>, #tpu.dimension_semantics<arbitrary>], iteration_bounds = array<i64: 1, 1, 1>, scalar_prefetch = 0 : i64, scratch_operands = 1 : i64, tpu.core_type = #tpu.core_type<tc>, window_params = [{transform_indices = @transform_0, window_bounds = array<i64: 16, 32>}, {pipeline_mode = #tpu.pipeline_mode<synchronous>, transform_indices = @transform_1, window_bounds = array<i64: 32, 64>}, {pipeline_mode = #tpu.pipeline_mode<synchronous>, transform_indices = @transform_2, window_bounds = array<i64: 1, 64>}, {transform_indices = @transform_3, window_bounds = array<i64: 64, 128>}, {transform_indices = @transform_4, window_bounds = array<i64: 1, 128>}, {transform_indices = @transform_5, window_bounds = array<i64: 16, 128>}]} {
    %c0_i32 = arith.constant 0 : i32
    %0 = arith.cmpi eq, %arg2, %c0_i32 : i32
    %1 = arith.extui %0 : i1 to i32
    %c0_i32_0 = arith.constant 0 : i32
    %2 = arith.cmpi ne, %1, %c0_i32_0 : i32
    scf.if %2 {
      %c0_8 = arith.constant 0 : index
      %c0_9 = arith.constant 0 : index
      %10 = vector.load %arg3[%c0_8, %c0_9] : memref<16x32xf32, #tpu.memory_space<vmem>>, vector<16x32xf32>
      %c0_10 = arith.constant 0 : index
      %c0_11 = arith.constant 0 : index
      %11 = vector.load %arg4[%c0_10, %c0_11] : memref<32x64xf32, #tpu.memory_space<vmem>>, vector<32x64xf32>
      %cst_12 = arith.constant dense<0.000000e+00> : vector<16x64xf32>
      %12 = tpu.matmul %10, %11, %cst_12 {dimension_numbers = #tpu.dot_dimension_numbers<[1], [0], [0], [1], [0, 0, 1, 1], [], []>} : vector<16x32xf32>, vector<32x64xf32>, vector<16x64xf32> -> vector<16x64xf32>
      %c0_13 = arith.constant 0 : index
      %c0_14 = arith.constant 0 : index
      %13 = vector.load %arg5[%c0_13, %c0_14] : memref<1x64xf32, #tpu.memory_space<vmem>>, vector<1x64xf32>
      %14 = vector.broadcast %13 : vector<1x64xf32> to vector<16x64xf32>
      %15 = arith.addf %12, %14 : vector<16x64xf32>
      %cst_15 = arith.constant 5.000000e-01 : f32
      %16 = vector.broadcast %cst_15 : f32 to vector<16x64xf32>
      %17 = arith.mulf %16, %15 : vector<16x64xf32>
      %cst_16 = arith.constant 0.707106769 : f32
      %18 = vector.broadcast %cst_16 : f32 to vector<16x64xf32>
      %19 = arith.mulf %15, %18 : vector<16x64xf32>
      %20 = math.erf %19 : vector<16x64xf32>
      %cst_17 = arith.constant 1.000000e+00 : f32
      %21 = vector.broadcast %cst_17 : f32 to vector<16x64xf32>
      %22 = arith.addf %21, %20 : vector<16x64xf32>
      %23 = arith.mulf %17, %22 : vector<16x64xf32>
      %c0_18 = arith.constant 0 : index
      %c0_19 = arith.constant 0 : index
      %24 = vector.load %arg9[%c0_18, %c0_19] : memref<16x64xf32, #tpu.memory_space<vmem>>, vector<16x64xf32>
      tpu.vector_store %arg9[%c0_18, %c0_19], %23 {strides = array<i32>} : memref<16x64xf32, #tpu.memory_space<vmem>>, vector<16x64xf32>,
    } else {
    }
    %c0 = arith.constant 0 : index
    %c0_1 = arith.constant 0 : index
    %3 = vector.load %arg9[%c0, %c0_1] : memref<16x64xf32, #tpu.memory_space<vmem>>, vector<16x64xf32>
    %c0_2 = arith.constant 0 : index
    %c0_3 = arith.constant 0 : index
    %4 = vector.load %arg6[%c0_2, %c0_3] : memref<64x128xf32, #tpu.memory_space<vmem>>, vector<64x128xf32>
    %cst = arith.constant dense<0.000000e+00> : vector<16x128xf32>
    %5 = tpu.matmul %3, %4, %cst {dimension_numbers = #tpu.dot_dimension_numbers<[1], [0], [0], [1], [0, 0, 1, 1], [], []>} : vector<16x64xf32>, vector<64x128xf32>, vector<16x128xf32> -> vector<16x128xf32>
    %c0_4 = arith.constant 0 : index
    %c0_5 = arith.constant 0 : index
    %6 = vector.load %arg7[%c0_4, %c0_5] : memref<1x128xf32, #tpu.memory_space<vmem>>, vector<1x128xf32>
    %7 = vector.broadcast %6 : vector<1x128xf32> to vector<16x128xf32>
    %8 = arith.addf %5, %7 : vector<16x128xf32>
    %c0_6 = arith.constant 0 : index
    %c0_7 = arith.constant 0 : index
    %9 = vector.load %arg8[%c0_6, %c0_7] : memref<16x128xf32, #tpu.memory_space<vmem>>, vector<16x128xf32>
    tpu.vector_store %arg8[%c0_6, %c0_7], %8 {strides = array<i32>} : memref<16x128xf32, #tpu.memory_space<vmem>>, vector<16x128xf32>,
    return
  }
  func.func @transform_0(%arg0: i32, %arg1: i32, %arg2: i32) -> (i32, i32) {
    %c0_i32 = arith.constant 0 : i32
    %c0_i32_0 = arith.constant 0 : i32
    return %arg0, %c0_i32 : i32, i32
  }
  func.func @transform_1(%arg0: i32, %arg1: i32, %arg2: i32) -> (i32, i32) {
    %c0_i32 = arith.constant 0 : i32
    %c0_i32_0 = arith.constant 0 : i32
    %c0_i32_1 = arith.constant 0 : i32
    return %c0_i32, %c0_i32_0 : i32, i32
  }
  func.func @transform_2(%arg0: i32, %arg1: i32, %arg2: i32) -> (i32, i32) {
    %c0_i32 = arith.constant 0 : i32
    %c0_i32_0 = arith.constant 0 : i32
    %c0_i32_1 = arith.constant 0 : i32
    return %c0_i32, %c0_i32_0 : i32, i32
  }
  func.func @transform_3(%arg0: i32, %arg1: i32, %arg2: i32) -> (i32, i32) {
    %c1_i32 = arith.constant 1 : i32
    %0 = arith.muli %arg1, %c1_i32 : i32
    %1 = arith.addi %0, %arg2 : i32
    %c0_i32 = arith.constant 0 : i32
    %c0_i32_0 = arith.constant 0 : i32
    return %c0_i32, %1 : i32, i32
  }
  func.func @transform_4(%arg0: i32, %arg1: i32, %arg2: i32) -> (i32, i32) {
    %c1_i32 = arith.constant 1 : i32
    %0 = arith.muli %arg1, %c1_i32 : i32
    %1 = arith.addi %0, %arg2 : i32
    %c0_i32 = arith.constant 0 : i32
    %c0_i32_0 = arith.constant 0 : i32
    return %c0_i32, %1 : i32, i32
  }
  func.func @transform_5(%arg0: i32, %arg1: i32, %arg2: i32) -> (i32, i32) {
    %c1_i32 = arith.constant 1 : i32
    %0 = arith.muli %arg1, %c1_i32 : i32
    %1 = arith.addi %0, %arg2 : i32
    %c0_i32 = arith.constant 0 : i32
    return %arg0, %1 : i32, i32
  }
}

</mosaic_0001>

<llo_original>
// kernel: vision_head.1
$region0: #{vision_head.1}
  #allocation0 [shape = 'u32[]', space=smem, size = 0x4, offset = 0x4, fixed_abs, tag = 'smem constant byte address 0x4 - core index']
  #allocation1 [shape = 'u32[144,128]{1,0:T(1,128)}', space=vmem, size = 0x12000, scoped, tag = 'internal scratch']
  #allocation2 [shape = 'f32[16,64]{1,0:T(8,128)}', space=vmem, size = 0x2000, scoped, tag = 'scratch operand']
  %s0 = inlined_call_operand.hbm [shape: f32[16,32], index: 0, kind: input, shape index: {}]
  %s1 = inlined_call_operand.hbm [shape: f32[32,64], index: 1, kind: input, shape index: {}]
  %s2 = inlined_call_operand.vmem [shape: f32[1,64], index: 2, kind: input, shape index: {}]
  %s3 = inlined_call_operand.hbm [shape: f32[64,128], index: 3, kind: input, shape index: {}]
  %s4 = inlined_call_operand.vmem [shape: f32[1,128], index: 4, kind: input, shape index: {}]
  %s5 = inlined_call_operand.hbm [shape: f32[16,128], index: 5, kind: output, shape index: {}]
  %s6 = sld [smem:[#allocation0]]
  $region46: #{vision_head.1} parent=0
    _
  %s8 = ssub.s32 1, %s6
  %s9 = scalar_select 0, %s8, %s6
  $region1: #{vision_head.1} parent=0
    #allocation3 [shape = 'u8[8192]{0}', space=vmem, size = 0x2000, scoped, tag = 'input window, operand 0, single buffered']
    #allocation4 [shape = 's32[1]{0}', space=sflag, size = 0x4, scoped, tag = 'scoped memory for vision_head.1']
    #allocation5 [shape = 's32[1]{0}', space=sflag, size = 0x4, scoped, tag = 'scoped memory for vision_head.1']
    #allocation6 [shape = 'u8[16384]{0}', space=vmem, size = 0x4000, scoped, tag = 'input window, operand 1, single buffered']
    #allocation7 [shape = 's32[1]{0}', space=sflag, size = 0x4, scoped, tag = 'scoped memory for vision_head.1']
    #allocation8 [shape = 'u8[32768]{0}', space=vmem, size = 0x8000, scoped, tag = 'input window, operand 3, single buffered']
    #allocation9 [shape = 'u8[8192]{0}', space=vmem, size = 0x2000, scoped, tag = 'output window, operand 0, single buffered']
    %10 = vsyncpa [#allocation4], 0
    %11 = vsyncpa [#allocation7], 0
    %12 = vsyncpa [#allocation5], 0
    // Predicated region
    $region2: #{vision_head.1} parent=1 // pred_check
      _
    $region3: #{vision_head.1} parent=1 // pred_check_branch
      %14 = sbr.rel (0) target = $region5
    $region4: #{vision_head.1} parent=1 // pred_region
      %s16 = ssub.s32 256, 256
      %17 = vsyncadd [#allocation4], %s16
      %s18 = sshll.u32 [#allocation3], 4
      %s19 = int_to_ptr.vmem [resolvable:$true] %s18
      %24 = dma.hbm_to_vmem [thread:$0]  %s0, 256, %s19, [#allocation4], 128, 128, 8
    $region5: #{vision_head.1} parent=1 // pred_fallthru
      _
    // Predicated region
    $region6: #{vision_head.1} parent=1 // pred_check
      _
    $region7: #{vision_head.1} parent=1 // pred_check_branch
      %26 = sbr.rel (0) target = $region9
    $region8: #{vision_head.1} parent=1 // pred_region
      %s28 = ssub.s32 512, 512
      %29 = vsyncadd [#allocation7], %s28
      %s30 = sshll.u32 [#allocation6], 4
      %s31 = int_to_ptr.vmem [resolvable:$true] %s30
      %36 = dma.hbm_to_vmem [thread:$0]  %s1, 512, %s31, [#allocation7], 128, 128, 8
    $region9: #{vision_head.1} parent=1 // pred_fallthru
      _
    // Predicated region
    $region10: #{vision_head.1} parent=1 // pred_check
      _
    $region11: #{vision_head.1} parent=1 // pred_check_branch
      %38 = sbr.rel (0) target = $region13
    $region12: #{vision_head.1} parent=1 // pred_region
      _
    $region13: #{vision_head.1} parent=1 // pred_fallthru
      _
    // Predicated region
    $region14: #{vision_head.1} parent=1 // pred_check
      _
    $region15: #{vision_head.1} parent=1 // pred_check_branch
      %40 = sbr.rel (0) target = $region17
    $region16: #{vision_head.1} parent=1 // pred_region
      %s41 = sadd.s32 0, 0
      %s43 = ssub.s32 1024, 1024
      %44 = vsyncadd [#allocation7], %s43
      %s45 = smul.addr %s41, 128
      %s46 = scalar_lea.hbm %s3, %s45
      %s47 = sshll.u32 [#allocation8], 4
      %s48 = int_to_ptr.vmem [resolvable:$true] %s47
      %53 = dma.hbm_to_vmem [thread:$0]  %s46, 1024, %s48, [#allocation7], 128, 128, 8
    $region17: #{vision_head.1} parent=1 // pred_fallthru
      _
    // Predicated region
    $region18: #{vision_head.1} parent=1 // pred_check
      _
    $region19: #{vision_head.1} parent=1 // pred_check_branch
      %55 = sbr.rel (0) target = $region21
    $region20: #{vision_head.1} parent=1 // pred_region
      %s56 = sadd.s32 0, 0
      %p57 = scmp.lt.s32.totalorder %s56, 0
      %s58 = scalar_select %p57, %s56, 0
      %s59 = scalar_lea.vmem %s4, %s58
      %s60 = sadd.s32 0, 0
    $region21: #{vision_head.1} parent=1 // pred_fallthru
      _
    // Predicated region
    $region22: #{vision_head.1} parent=1 // pred_check
      _
    $region23: #{vision_head.1} parent=1 // pred_check_branch
      %62 = sbr.rel (0) target = $region25
    $region24: #{vision_head.1} parent=1 // pred_region
      %63 = dma.done [#allocation4], 256
    $region25: #{vision_head.1} parent=1 // pred_fallthru
      _
    // Predicated region
    $region26: #{vision_head.1} parent=1 // pred_check
      _
    $region27: #{vision_head.1} parent=1 // pred_check_branch
      %65 = sbr.rel (0) target = $region29
    $region28: #{vision_head.1} parent=1 // pred_region
      %66 = dma.done [#allocation7], 512
    $region29: #{vision_head.1} parent=1 // pred_fallthru
      _
    // Predicated region
    $region30: #{vision_head.1} parent=1 // pred_check
      _
    $region31: #{vision_head.1} parent=1 // pred_check_branch
      %68 = sbr.rel (0) target = $region33
    $region32: #{vision_head.1} parent=1 // pred_region
      %69 = dma.done [#allocation7], 1024
    $region33: #{vision_head.1} parent=1 // pred_fallthru
      _
    %s70 = sadd.s32 0, 0
    %p71 = scmp.lt.s32.totalorder %s70, 0
    %s72 = scalar_select %p71, %s70, 0
    %s73 = scalar_lea.vmem %s4, %s72
    %s74 = sadd.s32 0, 0
    %s75 = sadd.s32 0, 0
    %p76 = scmp.lt.s32.totalorder %s75, 0
    %s77 = scalar_select %p76, %s75, 0
    %s78 = scalar_lea.vmem %s4, %s77
    %s79 = sadd.s32 0, 0
    %s80 = sadd.s32 0, 0
    %p81 = scmp.eq.s32.totalorder 0, 0
    // Predicated region
    $region34: #{vision_head.1} parent=1 // pred_check
      %p82 = pneg %p81
    $region35: #{vision_head.1} parent=1 // pred_check_branch
      %84 = sbr.rel (%p82) target = $region37
    $region36: #{vision_head.1} parent=1 // pred_region
      %v85 = vld [vmem:[#allocation3] sm:$0xff]
      %v86 = vld [vmem:[#allocation3 + $0x8] sm:$0xff]
      %v87 = vld [vmem:[#allocation6] sm:$0xff]
      %v88 = vld [vmem:[#allocation6 + $0x8] sm:$0xff]
      %v89 = vld [vmem:[#allocation6 + $0x10] sm:$0xff]
      %v90 = vld [vmem:[#allocation6 + $0x18] sm:$0xff]
      %v91 = vld [vmem:[%s2] sm:$0x1]
      %v93 = vlaneseq
      %v94 = vshrl.u32 %v93, 7
      %v95 = vsub.s32 0, %v94
      %v96 = vrot.slane %v91, %v95
      %vm98 = vcmask 261120
      %v100 = vsel %vm98, %v85, 0
      %v103 = vsel %vm98, %v86, 0
      %105 = vmatprep.subr.mxu0 0.0
      %106 = vmatpush1.msra.mxu0 0.0
      %107 = vmatprep.subr.mxu0 0.0
      %108 = vmatpush1.msra.mxu0 0.0
      %109 = vmatprep.subr.mxu0 0.0
      %110 = vmatpush1.msra.mxu0 0.0
      %111 = vmatprep.subr.mxu0 0.0
      %112 = vmatpush1.msra.mxu0 0.0
      %113 = vmatprep.subr.mxu0 0.0
      %114 = vmatpush1.msra.mxu0 0.0
      %115 = vmatprep.subr.mxu0 0.0
      %116 = vmatpush1.msra.mxu0 0.0
      %117 = vmatprep.subr.mxu0 0.0
      %118 = vmatpush1.msra.mxu0 0.0
      %119 = vmatprep.subr.mxu0 0.0
      %120 = vmatpush1.msra.mxu0 0.0
      %121 = vmatprep.subr.mxu0 0.0
      %122 = vmatpush1.msra.mxu0 0.0
      %123 = vmatprep.subr.mxu0 0.0
      %124 = vmatpush1.msra.mxu0 0.0
      %125 = vmatprep.subr.mxu0 0.0
      %126 = vmatpush1.msra.mxu0 0.0
      %127 = vmatprep.subr.mxu0 0.0
      %128 = vmatpush1.msra.mxu0 0.0
      %129 = vmatprep.subr.mxu0 0.0
      %130 = vmatpush1.msra.mxu0 %v90
      %131 = vmatprep.subr.mxu0 0.0
      %132 = vmatpush1.msra.mxu0 %v89
      %133 = vmatprep.subr.mxu0 0.0
      %134 = vmatpush1.msra.mxu0 %v88
      %135 = vmatprep.subr.mxu0 0.0
      %136 = vmatpush1.msra.mxu0 %v87
      %137 = vmatprep.subr.mxu0 0.0
      %138 = vmatpush2.msra.mxu0 0.0
      %139 = vmatprep.subr.mxu0 0.0
      %140 = vmatpush2.msra.mxu0 0.0
      %141 = vmatprep.subr.mxu0 0.0
      %142 = vmatpush2.msra.mxu0 0.0
      %143 = vmatprep.subr.mxu0 0.0
      %144 = vmatpush2.msra.mxu0 0.0
      %145 = vmatprep.subr.mxu0 0.0
      %146 = vmatpush2.msra.mxu0 0.0
      %147 = vmatprep.subr.mxu0 0.0
      %148 = vmatpush2.msra.mxu0 0.0
      %149 = vmatprep.subr.mxu0 0.0
      %150 = vmatpush2.msra.mxu0 0.0
      %151 = vmatprep.subr.mxu0 0.0
      %152 = vmatpush2.msra.mxu0 0.0
      %153 = vmatprep.subr.mxu0 0.0
      %154 = vmatpush2.msra.mxu0 0.0
      %155 = vmatprep.subr.mxu0 0.0
      %156 = vmatpush2.msra.mxu0 0.0
      %157 = vmatprep.subr.mxu0 0.0
      %158 = vmatpush2.msra.mxu0 0.0
      %159 = vmatprep.subr.mxu0 0.0
      %160 = vmatpush2.msra.mxu0 0.0
      %161 = vmatprep.subr.mxu0 0.0
      %162 = vmatpush2.msra.mxu0 0.0
      %163 = vmatprep.subr.mxu0 0.0
      %164 = vmatpush2.msra.mxu0 0.0
      %165 = vmatprep.subr.mxu0 0.0
      %166 = vmatpush2.msra.mxu0 0.0
      %167 = vmatprep.subr.mxu0 0.0
      %168 = vmatpush2.msra.mxu0 0.0
      %169 = vmatprep.mubr.f32.mxu0 0.0
      %170 = vmatmul.mubr.f32.gmra.mxu0 %v100
      %v171 = vpop.f32.mrf.mxu0
      %v172 = vadd.f32 %v96, %v171
      %v173 = vpop.f32.mrf.mxu0
      %174 = vmatprep.mubr.f32.mxu0 0.0
      %175 = vmatmul.mubr.f32.gmra.mxu0 %v103
      %v176 = vpop.f32.mrf.mxu0
      %v177 = vadd.f32 %v96, %v176
      %v178 = vpop.f32.mrf.mxu0
      %179 = vdwg.mxu0
      %v180 = vmul.f32 %v172, 0.5
      %v181 = vmul.f32 %v177, 0.5
      %v182 = vmul.f32 %v172, 0.70710677
      %v183 = vmul.f32 %v177, 0.70710677
      %v184 = verf.f32.pop %v182
      %v185 = verf.f32.pop %v183
      %v186 = vadd.f32 %v184, 1.0
      %v187 = vadd.f32 %v185, 1.0
      %v188 = vmul.f32 %v180, %v186
      %v189 = vmul.f32 %v181, %v187
      %vm190 = vcmask 523264
      %191 = vst.msk [vmem:[#allocation2] sm:$0xff] %vm190, %v188
      %192 = vst.msk [vmem:[#allocation2 + $0x8] sm:$0xff] %vm190, %v189
    $region37: #{vision_head.1} parent=1 // pred_fallthru
      _
    %v193 = vld [vmem:[#allocation2] sm:$0xff]
    %v194 = vld [vmem:[#allocation2 + $0x8] sm:$0xff]
    %v195 = vld [vmem:[#allocation8] sm:$0xff]
    %v196 = vld [vmem:[#allocation8 + $0x8] sm:$0xff]
    %v197 = vld [vmem:[#allocation8 + $0x10] sm:$0xff]
    %v198 = vld [vmem:[#allocation8 + $0x18] sm:$0xff]
    %v199 = vld [vmem:[#allocation8 + $0x20] sm:$0xff]
    %v200 = vld [vmem:[#allocation8 + $0x28] sm:$0xff]
    %v201 = vld [vmem:[#allocation8 + $0x30] sm:$0xff]
    %v202 = vld [vmem:[#allocation8 + $0x38] sm:$0xff]
    %v203 = vld [vmem:[%s78] sm:$0x1]
    %v205 = vlaneseq
    %v206 = vshrl.u32 %v205, 7
    %v207 = vsub.s32 0, %v206
    %v208 = vrot.slane %v203, %v207
    %vm210 = vcmask 523264
    %v212 = vsel %vm210, %v193, 0
    %v215 = vsel %vm210, %v194, 0
    %217 = vmatprep.subr.mxu0 0.0
    %218 = vmatpush1.msra.mxu0 0.0
    %219 = vmatprep.subr.mxu0 0.0
    %220 = vmatpush1.msra.mxu0 0.0
    %221 = vmatprep.subr.mxu0 0.0
    %222 = vmatpush1.msra.mxu0 0.0
    %223 = vmatprep.subr.mxu0 0.0
    %224 = vmatpush1.msra.mxu0 0.0
    %225 = vmatprep.subr.mxu0 0.0
    %226 = vmatpush1.msra.mxu0 0.0
    %227 = vmatprep.subr.mxu0 0.0
    %228 = vmatpush1.msra.mxu0 0.0
    %229 = vmatprep.subr.mxu0 0.0
    %230 = vmatpush1.msra.mxu0 0.0
    %231 = vmatprep.subr.mxu0 0.0
    %232 = vmatpush1.msra.mxu0 0.0
    %233 = vmatprep.subr.mxu0 0.0
    %234 = vmatpush1.msra.mxu0 %v202
    %235 = vmatprep.subr.mxu0 0.0
    %236 = vmatpush1.msra.mxu0 %v201
    %237 = vmatprep.subr.mxu0 0.0
    %238 = vmatpush1.msra.mxu0 %v200
    %239 = vmatprep.subr.mxu0 0.0
    %240 = vmatpush1.msra.mxu0 %v199
    %241 = vmatprep.subr.mxu0 0.0
    %242 = vmatpush1.msra.mxu0 %v198
    %243 = vmatprep.subr.mxu0 0.0
    %244 = vmatpush1.msra.mxu0 %v197
    %245 = vmatprep.subr.mxu0 0.0
    %246 = vmatpush1.msra.mxu0 %v196
    %247 = vmatprep.subr.mxu0 0.0
    %248 = vmatpush1.msra.mxu0 %v195
    %249 = vmatprep.subr.mxu0 0.0
    %250 = vmatpush2.msra.mxu0 0.0
    %251 = vmatprep.subr.mxu0 0.0
    %252 = vmatpush2.msra.mxu0 0.0
    %253 = vmatprep.subr.mxu0 0.0
    %254 = vmatpush2.msra.mxu0 0.0
    %255 = vmatprep.subr.mxu0 0.0
    %256 = vmatpush2.msra.mxu0 0.0
    %257 = vmatprep.subr.mxu0 0.0
    %258 = vmatpush2.msra.mxu0 0.0
    %259 = vmatprep.subr.mxu0 0.0
    %260 = vmatpush2.msra.mxu0 0.0
    %261 = vmatprep.subr.mxu0 0.0
    %262 = vmatpush2.msra.mxu0 0.0
    %263 = vmatprep.subr.mxu0 0.0
    %264 = vmatpush2.msra.mxu0 0.0
    %265 = vmatprep.subr.mxu0 0.0
    %266 = vmatpush2.msra.mxu0 0.0
    %267 = vmatprep.subr.mxu0 0.0
    %268 = vmatpush2.msra.mxu0 0.0
    %269 = vmatprep.subr.mxu0 0.0
    %270 = vmatpush2.msra.mxu0 0.0
    %271 = vmatprep.subr.mxu0 0.0
    %272 = vmatpush2.msra.mxu0 0.0
    %273 = vmatprep.subr.mxu0 0.0
    %274 = vmatpush2.msra.mxu0 0.0
    %275 = vmatprep.subr.mxu0 0.0
    %276 = vmatpush2.msra.mxu0 0.0
    %277 = vmatprep.subr.mxu0 0.0
    %278 = vmatpush2.msra.mxu0 0.0
    %279 = vmatprep.subr.mxu0 0.0
    %280 = vmatpush2.msra.mxu0 0.0
    %281 = vmatprep.mubr.f32.mxu0 0.0
    %282 = vmatmul.mubr.f32.gmra.mxu0 %v212
    %v283 = vpop.f32.mrf.mxu0
    %v284 = vadd.f32 %v208, %v283
    %v285 = vpop.f32.mrf.mxu0
    %286 = vmatprep.mubr.f32.mxu0 0.0
    %287 = vmatmul.mubr.f32.gmra.mxu0 %v215
    %v288 = vpop.f32.mrf.mxu0
    %v289 = vadd.f32 %v208, %v288
    %v290 = vpop.f32.mrf.mxu0
    %291 = vdwg.mxu0
    %292 = vst [vmem:[#allocation9] sm:$0xff] %v284
    %293 = vst [vmem:[#allocation9 + $0x8] sm:$0xff] %v289
    // Predicated region
    $region38: #{vision_head.1} parent=1 // pred_check
      _
    $region39: #{vision_head.1} parent=1 // pred_check_branch
      %295 = sbr.rel (0) target = $region41
    $region40: #{vision_head.1} parent=1 // pred_region
      %s296 = sadd.s32 0, 0
      %s298 = ssub.s32 256, 256
      %299 = vsyncadd [#allocation5], %s298
      %s300 = smul.addr %s296, 128
      %s301 = scalar_lea.hbm %s5, %s300
      %s302 = sshll.u32 [#allocation9], 4
      %s303 = int_to_ptr.vmem [resolvable:$true] %s302
      %308 = dma.vmem_to_hbm [thread:$0]  %s303, 256, %s301, [#allocation5], 128, 128, 8
    $region41: #{vision_head.1} parent=1 // pred_fallthru
      _
    // Predicated region
    $region42: #{vision_head.1} parent=1 // pred_check
      _
    $region43: #{vision_head.1} parent=1 // pred_check_branch
      %310 = sbr.rel (0) target = $region45
    $region44: #{vision_head.1} parent=1 // pred_region
      %311 = dma.done [#allocation5], 256
    $region45: #{vision_head.1} parent=1 // pred_fallthru
      _
    %312 = vsyncpa [#allocation4], 1
    %313 = vsyncpa [#allocation7], 1
    %314 = vsyncpa [#allocation5], 1

</llo_original>
